<compile_context>
chip_gen: v7x
topology: tpu7x:2x2x1
jax: 0.10.0
libtpu: 0.0.40
codegen_flags: <defaults>
</compile_context>

<pallas_src>
import jax
import jax.numpy as jnp
from jax.experimental import pallas as pl
from jax.experimental.pallas import tpu as pltpu


def _ru128(n):
  return ((n + 127) // 128) * 128


# --------------------------------------------------------------------------
# Kernel: one grid step == one decode time step.  Hidden carried in VMEM.
# --------------------------------------------------------------------------
def attn_decoder_kernel(xs_ref, h0_ref, enc_ref, wA_ref, wB_ref, b_ref,
                        out_ref, h_scr):
  f32 = jnp.float32
  B, O = xs_ref.shape          # per-step input (time dim squeezed away)
  L, H = enc_ref.shape
  PW = out_ref.shape[1]
  la = _ru128(L)               # aligned lane offset of the combine weight in wA

  t = pl.program_id(0)

  @pl.when(t == 0)
  def _():
    h_scr[...] = h0_ref[...]

  x = xs_ref[...]              # (B, O)  f32
  h = h_scr[...]               # (B, H)  f32  (carried hidden)

  # ---- attention scores: cat(x, h) @ Wa^T + b_a (weight split at row O so
  #      no in-kernel concat is needed), then softmax over dim=1 -------------
  scores = (jnp.dot(x, wA_ref[:O, :L], preferred_element_type=f32)
            + jnp.dot(h, wA_ref[O:, :L], preferred_element_type=f32)
            + b_ref[0:1, :L])                                   # (B, L)
  m = jnp.max(scores, axis=1, keepdims=True)
  e = jnp.exp(scores - m)
  # exact reciprocal keeps the tight attn_weights tolerance; approx=True would
  # route to the EUP vrcp if ~1e-3 relative error were acceptable.
  attn_w = e * pl.reciprocal(jnp.sum(e, axis=1, keepdims=True), approx=False)

  # ---- attn_applied = bmm(attn_w, encoder_outputs) --------------------------
  attn_applied = jnp.dot(attn_w, enc_ref[...], preferred_element_type=f32)  # (B, H)

  # ---- attn_combine(cat(x, attn_applied)) + ReLU ----------------------------
  comb = (jnp.dot(x, wA_ref[:O, la:la + H], preferred_element_type=f32)
          + jnp.dot(attn_applied, wA_ref[O:, la:la + H],
                    preferred_element_type=f32)
          + b_ref[1:2, :H])                                     # (B, H)
  gru_in = jnp.maximum(comb, 0.0)

  # ---- single-step GRU, PyTorch gate order (r, z, n); 2 fused (H,3H) dots --
  gi = (jnp.dot(gru_in, wB_ref[:H, :3 * H], preferred_element_type=f32)
        + b_ref[2:3, :3 * H])
  gh = (jnp.dot(h, wB_ref[H:2 * H, :3 * H], preferred_element_type=f32)
        + b_ref[3:4, :3 * H])
  r = jax.nn.sigmoid(gi[:, :H] + gh[:, :H])
  z = jax.nn.sigmoid(gi[:, H:2 * H] + gh[:, H:2 * H])
  n = jnp.tanh(gi[:, 2 * H:] + r * gh[:, 2 * H:])
  h_new = (1.0 - z) * n + z * h                                 # (B, H)

  # ---- out linear + log_softmax over dim=1 ----------------------------------
  logits = (jnp.dot(h_new, wB_ref[2 * H:, :O], preferred_element_type=f32)
            + b_ref[4:5, :O])                                   # (B, O)
  m2 = jnp.max(logits, axis=1, keepdims=True)
  lse = jnp.log(jnp.sum(jnp.exp(logits - m2), axis=1, keepdims=True)) + m2
  log_probs = logits - lse

  # carry hidden to the next grid step
  h_scr[...] = h_new

  # ---- ONE lane-dense full-width store: [log_probs | h_new | attn_w | 0] ----
  pad = jnp.zeros((B, PW - (O + H + L)), f32)
  out_ref[...] = jnp.concatenate([log_probs, h_new, attn_w, pad], axis=1)


def _fixed_spec(shape):
  nd = len(shape)
  return pl.BlockSpec(shape, lambda t, _nd=nd: (0,) * _nd)


# --------------------------------------------------------------------------
# One-time parameter packing (hoisted OUT of the decode loop)
# --------------------------------------------------------------------------
def pack_params(params):
  """Re-layout PyTorch-style parameters into 3 f32 kernel slabs. Call once."""
  f32 = jnp.float32
  H = params["w_hh"].shape[1]
  O = params["out_w"].shape[0]
  L = params["attn_w"].shape[0]
  OH = O + H
  la = _ru128(L)
  lc = _ru128(H)

  # Slab A: 48 rows, lanes [0:L) = attn weight, lanes [la:la+H) = combine wt.
  wA = jnp.zeros((OH, la + lc), f32)
  wA = wA.at[:, :L].set(params["attn_w"].T.astype(f32))
  wA = wA.at[:, la:la + H].set(params["comb_w"].T.astype(f32))

  # Slab B: rows [0:H)=w_ih^T, [H:2H)=w_hh^T, [2H:3H)=out weight^T (lane-pad).
  wB = jnp.zeros((3 * H, max(3 * H, O)), f32)
  wB = wB.at[:H, :3 * H].set(params["w_ih"].T.astype(f32))
  wB = wB.at[H:2 * H, :3 * H].set(params["w_hh"].T.astype(f32))
  wB = wB.at[2 * H:, :O].set(params["out_w"].T.astype(f32))

  # Bias slab: one lane-padded row per bias vector.
  bw = _ru128(max(L, H, 3 * H, O))
  pad1 = lambda b: jnp.pad(b.astype(f32), (0, bw - b.shape[0]))
  bias = jnp.zeros((8, bw), f32)
  bias = bias.at[0].set(pad1(params["attn_b"]))
  bias = bias.at[1].set(pad1(params["comb_b"]))
  bias = bias.at[2].set(pad1(params["b_ih"]))
  bias = bias.at[3].set(pad1(params["b_hh"]))
  bias = bias.at[4].set(pad1(params["out_b"]))

  return {"wA": wA, "wB": wB, "bias": bias}


# --------------------------------------------------------------------------
# Fused multi-step decode: ONE pallas_call, grid over time, weights resident.
# --------------------------------------------------------------------------
@jax.jit
def attn_decoder_decode(xs, hidden0, encoder_outputs, kp):
  """xs: (T,B,O)  hidden0: (1,B,H)  encoder_outputs: (L,H)  kp: pack_params().

  Returns (log_probs (T,B,O), hiddens (T,B,H), attn_weights (T,B,L))."""
  T, B, O = xs.shape
  H = hidden0.shape[-1]
  L = encoder_outputs.shape[0]
  PW = _ru128(O + H + L)          # packed, lane-dense output width

  operands = (xs, hidden0[0], encoder_outputs, kp["wA"], kp["wB"], kp["bias"])
  in_specs = [
      pl.BlockSpec((None, B, O), lambda t: (t, 0, 0)),   # per-step input
      _fixed_spec((B, H)),                               # initial hidden
      _fixed_spec((L, H)),                               # encoder outputs
      _fixed_spec(kp["wA"].shape),                       # weights: fixed block
      _fixed_spec(kp["wB"].shape),                       #   -> DMA'd once,
      _fixed_spec(kp["bias"].shape),                     #      VMEM-resident
  ]

  packed = pl.pallas_call(
      attn_decoder_kernel,
      grid=(T,),
      in_specs=in_specs,
      out_specs=pl.BlockSpec((None, B, PW), lambda t: (t, 0, 0)),
      out_shape=jax.ShapeDtypeStruct((T, B, PW), jnp.float32),
      scratch_shapes=[pltpu.VMEM((B, H), jnp.float32)],   # carried hidden
      compiler_params=pltpu.CompilerParams(
          dimension_semantics=("arbitrary",)),            # time is a carry
  )(*operands)

  log_probs = packed[:, :, :O]
  hiddens = packed[:, :, O:O + H]
  attn_ws = packed[:, :, O + H:O + H + L]
  return log_probs, hiddens, attn_ws


def attn_decoder_forward(inp, hidden, encoder_outputs, kp):
  """Module-equivalent single-step forward (T == 1 degenerate case).

  inp: (1,B,O)  hidden: (1,B,H) -> (output (B,O), hidden (1,B,H), attn (B,L))."""
  log_probs, hiddens, attn_ws = attn_decoder_decode(inp, hidden,
                                                    encoder_outputs, kp)
  return log_probs[0], hiddens[-1:], attn_ws[0]


# --------------------------------------------------------------------------
# Pure-JAX reference (PyTorch math), stepped one forward() at a time.
# --------------------------------------------------------------------------
def reference_forward(inp, hidden, enc, p):
  x0, h0 = inp[0], hidden[0]
  scores = jnp.concatenate([x0, h0], 1) @ p["attn_w"].T + p["attn_b"]
  aw = jax.nn.softmax(scores, axis=1)
  applied = aw @ enc
  comb = jnp.concatenate([x0, applied], 1) @ p["comb_w"].T + p["comb_b"]
  gru_in = jax.nn.relu(comb)
  gi = gru_in @ p["w_ih"].T + p["b_ih"]
  gh = h0 @ p["w_hh"].T + p["b_hh"]
  i_r, i_z, i_n = jnp.split(gi, 3, axis=1)
  h_r, h_z, h_n = jnp.split(gh, 3, axis=1)
  r = jax.nn.sigmoid(i_r + h_r)
  z = jax.nn.sigmoid(i_z + h_z)
  n = jnp.tanh(i_n + r * h_n)
  hn = (1.0 - z) * n + z * h0
  logits = hn @ p["out_w"].T + p["out_b"]
  return jax.nn.log_softmax(logits, axis=1), hn[None], aw


def init_params(key, H, O, L):
  ks = jax.random.split(key, 10)
  u = lambda k, shape, fan: jax.random.uniform(
      k, shape, jnp.float32, -1.0 / jnp.sqrt(fan), 1.0 / jnp.sqrt(fan))
  return {
      "attn_w": u(ks[0], (L, O + H), O + H),
      "attn_b": u(ks[1], (L,), O + H),
      "comb_w": u(ks[2], (H, O + H), O + H),
      "comb_b": u(ks[3], (H,), O + H),
      "w_ih":   u(ks[4], (3 * H, H), H),
      "w_hh":   u(ks[5], (3 * H, H), H),
      "b_ih":   u(ks[6], (3 * H,), H),
      "b_hh":   u(ks[7], (3 * H,), H),
      "out_w":  u(ks[8], (O, H), H),
      "out_b":  u(ks[9], (O,), H),
  }


if __name__ == "__main__":
  B, H, O, L, T = 8, 32, 16, 10, 3   # batch, hidden, output, max_length, steps
  key = jax.random.PRNGKey(0)
  k_h, k_enc, k_p, k_x = jax.random.split(key, 4)

  hidden0 = jax.random.normal(k_h, (1, B, H), jnp.float32)
  enc = jax.random.normal(k_enc, (L, H), jnp.float32)
  params = init_params(k_p, H, O, L)
  xs = jax.random.normal(k_x, (T, B, O), jnp.float32)

  # Parameter re-layout happens exactly once, outside the decode loop.
  kp = pack_params(params)

  # --- fused multi-step decode: one pallas_call over all T steps -----------
  log_probs, hiddens, attn_ws = jax.block_until_ready(
      attn_decoder_decode(xs, hidden0, enc, kp))
  assert log_probs.shape == (T, B, O)
  assert hiddens.shape == (T, B, H)
  assert attn_ws.shape == (T, B, L)

  # step-by-step reference with the carried hidden
  h_r = hidden0
  for t in range(T):
    out_r, h_r, aw_r = reference_forward(xs[t:t + 1], h_r, enc, params)
    assert jnp.allclose(log_probs[t], out_r, atol=5e-4, rtol=5e-4), f"out @ {t}"
    assert jnp.allclose(hiddens[t], h_r[0], atol=5e-4, rtol=5e-4), f"hidden @ {t}"
    assert jnp.allclose(attn_ws[t], aw_r, atol=1e-4, rtol=1e-3), f"attn @ {t}"

  # --- module-equivalent single-step forward (T == 1) ----------------------
  out1, h1, aw1 = jax.block_until_ready(
      attn_decoder_forward(xs[:1], hidden0, enc, kp))
  out_r1, h_r1, aw_r1 = reference_forward(xs[:1], hidden0, enc, params)
  assert out1.shape == (B, O) and h1.shape == (1, B, H) and aw1.shape == (B, L)
  assert jnp.allclose(out1, out_r1, atol=5e-4, rtol=5e-4)
  assert jnp.allclose(h1, h_r1, atol=5e-4, rtol=5e-4)
  assert jnp.allclose(aw1, aw_r1, atol=1e-4, rtol=1e-3)

  print("KERNEL_OK")
</pallas_src>

<mosaic_0001>
module attributes {stable_mosaic.version = 11 : i64} {
  func.func @attn_decoder_kernel(%arg0: i32, %arg1: memref<1x8x16xf32, #tpu.memory_space<vmem>>, %arg2: memref<8x32xf32, #tpu.memory_space<vmem>>, %arg3: memref<10x32xf32, #tpu.memory_space<vmem>>, %arg4: memref<48x256xf32, #tpu.memory_space<vmem>>, %arg5: memref<96x96xf32, #tpu.memory_space<vmem>>, %arg6: memref<8x128xf32, #tpu.memory_space<vmem>>, %arg7: memref<1x8x128xf32, #tpu.memory_space<vmem>>, %arg8: memref<8x32xf32, #tpu.memory_space<vmem>>) attributes {dimension_semantics = [#tpu.dimension_semantics<arbitrary>], iteration_bounds = array<i64: 3>, scalar_prefetch = 0 : i64, scratch_operands = 1 : i64, tpu.core_type = #tpu.core_type<tc>, window_params = [{transform_indices = @transform_0, window_bounds = array<i64: 1, 8, 16>}, {pipeline_mode = #tpu.pipeline_mode<synchronous>, transform_indices = @transform_1, window_bounds = array<i64: 8, 32>}, {pipeline_mode = #tpu.pipeline_mode<synchronous>, transform_indices = @transform_2, window_bounds = array<i64: 10, 32>}, {pipeline_mode = #tpu.pipeline_mode<synchronous>, transform_indices = @transform_3, window_bounds = array<i64: 48, 256>}, {pipeline_mode = #tpu.pipeline_mode<synchronous>, transform_indices = @transform_4, window_bounds = array<i64: 96, 96>}, {pipeline_mode = #tpu.pipeline_mode<synchronous>, transform_indices = @transform_5, window_bounds = array<i64: 8, 128>}, {transform_indices = @transform_6, window_bounds = array<i64: 1, 8, 128>}]} {
    %c0_i32 = arith.constant 0 : i32
    %0 = arith.cmpi eq, %arg0, %c0_i32 : i32
    %1 = arith.extui %0 : i1 to i32
    %c0_i32_0 = arith.constant 0 : i32
    %2 = arith.cmpi ne, %1, %c0_i32_0 : i32
    scf.if %2 {
      %c0_44 = arith.constant 0 : index
      %c0_45 = arith.constant 0 : index
      %94 = vector.load %arg2[%c0_44, %c0_45] : memref<8x32xf32, #tpu.memory_space<vmem>>, vector<8x32xf32>
      %c0_46 = arith.constant 0 : index
      %c0_47 = arith.constant 0 : index
      %95 = vector.load %arg8[%c0_46, %c0_47] : memref<8x32xf32, #tpu.memory_space<vmem>>, vector<8x32xf32>
      tpu.vector_store %arg8[%c0_46, %c0_47], %94 {strides = array<i32>} : memref<8x32xf32, #tpu.memory_space<vmem>>, vector<8x32xf32>,
    } else {
    }
    %c0 = arith.constant 0 : index
    %c0_1 = arith.constant 0 : index
    %c0_2 = arith.constant 0 : index
    %3 = vector.load %arg1[%c0, %c0_1, %c0_2] : memref<1x8x16xf32, #tpu.memory_space<vmem>>, vector<1x8x16xf32>
    %4 = vector.shape_cast %3 : vector<1x8x16xf32> to vector<8x16xf32>
    %c0_3 = arith.constant 0 : index
    %c0_4 = arith.constant 0 : index
    %5 = vector.load %arg8[%c0_3, %c0_4] : memref<8x32xf32, #tpu.memory_space<vmem>>, vector<8x32xf32>
    %c0_5 = arith.constant 0 : index
    %c0_6 = arith.constant 0 : index
    %6 = vector.load %arg4[%c0_5, %c0_6] : memref<48x256xf32, #tpu.memory_space<vmem>>, vector<16x10xf32>
    %cst = arith.constant dense<0.000000e+00> : vector<8x10xf32>
    %7 = tpu.matmul %4, %6, %cst {dimension_numbers = #tpu.dot_dimension_numbers<[1], [0], [0], [1], [0, 0, 1, 1], [], []>} : vector<8x16xf32>, vector<16x10xf32>, vector<8x10xf32> -> vector<8x10xf32>
    %c16 = arith.constant 16 : index
    %c0_7 = arith.constant 0 : index
    %8 = vector.load %arg4[%c16, %c0_7] : memref<48x256xf32, #tpu.memory_space<vmem>>, vector<32x10xf32>
    %cst_8 = arith.constant dense<0.000000e+00> : vector<8x10xf32>
    %9 = tpu.matmul %5, %8, %cst_8 {dimension_numbers = #tpu.dot_dimension_numbers<[1], [0], [0], [1], [0, 0, 1, 1], [], []>} : vector<8x32xf32>, vector<32x10xf32>, vector<8x10xf32> -> vector<8x10xf32>
    %10 = arith.addf %7, %9 : vector<8x10xf32>
    %c0_9 = arith.constant 0 : index
    %c0_10 = arith.constant 0 : index
    %11 = vector.load %arg6[%c0_9, %c0_10] : memref<8x128xf32, #tpu.memory_space<vmem>>, vector<1x10xf32>
    %12 = vector.broadcast %11 : vector<1x10xf32> to vector<8x10xf32>
    %13 = arith.addf %10, %12 : vector<8x10xf32>
    %cst_11 = arith.constant dense<0xFF800000> : vector<8xf32>
    %14 = vector.multi_reduction <maximumf>, %13, %cst_11 [1] : vector<8x10xf32> to vector<8xf32>
    %15 = vector.shape_cast %14 : vector<8xf32> to vector<8x1xf32>
    %16 = vector.broadcast %15 : vector<8x1xf32> to vector<8x10xf32>
    %17 = arith.subf %13, %16 : vector<8x10xf32>
    %18 = math.exp %17 : vector<8x10xf32>
    %cst_12 = arith.constant dense<0.000000e+00> : vector<8xf32>
    %19 = vector.multi_reduction <add>, %18, %cst_12 [1] : vector<8x10xf32> to vector<8xf32>
    %20 = vector.shape_cast %19 : vector<8xf32> to vector<8x1xf32>
    %21 = tpu.reciprocal %20 : vector<8x1xf32> -> vector<8x1xf32>
    %22 = vector.broadcast %21 : vector<8x1xf32> to vector<8x10xf32>
    %23 = arith.mulf %18, %22 : vector<8x10xf32>
    %c0_13 = arith.constant 0 : index
    %c0_14 = arith.constant 0 : index
    %24 = vector.load %arg3[%c0_13, %c0_14] : memref<10x32xf32, #tpu.memory_space<vmem>>, vector<10x32xf32>
    %cst_15 = arith.constant dense<0.000000e+00> : vector<8x32xf32>
    %25 = tpu.matmul %23, %24, %cst_15 {dimension_numbers = #tpu.dot_dimension_numbers<[1], [0], [0], [1], [0, 0, 1, 1], [], []>} : vector<8x10xf32>, vector<10x32xf32>, vector<8x32xf32> -> vector<8x32xf32>
    %c0_16 = arith.constant 0 : index
    %c128 = arith.constant 128 : index
    %26 = vector.load %arg4[%c0_16, %c128] : memref<48x256xf32, #tpu.memory_space<vmem>>, vector<16x32xf32>
    %cst_17 = arith.constant dense<0.000000e+00> : vector<8x32xf32>
    %27 = tpu.matmul %4, %26, %cst_17 {dimension_numbers = #tpu.dot_dimension_numbers<[1], [0], [0], [1], [0, 0, 1, 1], [], []>} : vector<8x16xf32>, vector<16x32xf32>, vector<8x32xf32> -> vector<8x32xf32>
    %c16_18 = arith.constant 16 : index
    %c128_19 = arith.constant 128 : index
    %28 = vector.load %arg4[%c16_18, %c128_19] : memref<48x256xf32, #tpu.memory_space<vmem>>, vector<32x32xf32>
    %cst_20 = arith.constant dense<0.000000e+00> : vector<8x32xf32>
    %29 = tpu.matmul %25, %28, %cst_20 {dimension_numbers = #tpu.dot_dimension_numbers<[1], [0], [0], [1], [0, 0, 1, 1], [], []>} : vector<8x32xf32>, vector<32x32xf32>, vector<8x32xf32> -> vector<8x32xf32>
    %30 = arith.addf %27, %29 : vector<8x32xf32>
    %c1 = arith.constant 1 : index
    %c0_21 = arith.constant 0 : index
    %31 = vector.load %arg6[%c1, %c0_21] : memref<8x128xf32, #tpu.memory_space<vmem>>, vector<1x32xf32>
    %32 = vector.broadcast %31 : vector<1x32xf32> to vector<8x32xf32>
    %33 = arith.addf %30, %32 : vector<8x32xf32>
    %cst_22 = arith.constant 0.000000e+00 : f32
    %34 = vector.broadcast %cst_22 : f32 to vector<8x32xf32>
    %35 = arith.maximumf %33, %34 : vector<8x32xf32>
    %c0_23 = arith.constant 0 : index
    %c0_24 = arith.constant 0 : index
    %36 = vector.load %arg5[%c0_23, %c0_24] : memref<96x96xf32, #tpu.memory_space<vmem>>, vector<32x96xf32>
    %cst_25 = arith.constant dense<0.000000e+00> : vector<8x96xf32>
    %37 = tpu.matmul %35, %36, %cst_25 {dimension_numbers = #tpu.dot_dimension_numbers<[1], [0], [0], [1], [0, 0, 1, 1], [], []>} : vector<8x32xf32>, vector<32x96xf32>, vector<8x96xf32> -> vector<8x96xf32>
    %c2 = arith.constant 2 : index
    %c0_26 = arith.constant 0 : index
    %38 = vector.load %arg6[%c2, %c0_26] : memref<8x128xf32, #tpu.memory_space<vmem>>, vector<1x96xf32>
    %39 = vector.broadcast %38 : vector<1x96xf32> to vector<8x96xf32>
    %40 = arith.addf %37, %39 : vector<8x96xf32>
    %c32 = arith.constant 32 : index
    %c0_27 = arith.constant 0 : index
    %41 = vector.load %arg5[%c32, %c0_27] : memref<96x96xf32, #tpu.memory_space<vmem>>, vector<32x96xf32>
    %cst_28 = arith.constant dense<0.000000e+00> : vector<8x96xf32>
    %42 = tpu.matmul %5, %41, %cst_28 {dimension_numbers = #tpu.dot_dimension_numbers<[1], [0], [0], [1], [0, 0, 1, 1], [], []>} : vector<8x32xf32>, vector<32x96xf32>, vector<8x96xf32> -> vector<8x96xf32>
    %c3 = arith.constant 3 : index
    %c0_29 = arith.constant 0 : index
    %43 = vector.load %arg6[%c3, %c0_29] : memref<8x128xf32, #tpu.memory_space<vmem>>, vector<1x96xf32>
    %44 = vector.broadcast %43 : vector<1x96xf32> to vector<8x96xf32>
    %45 = arith.addf %42, %44 : vector<8x96xf32>
    %46 = vector.extract_strided_slice %40 {offsets = [0, 0], sizes = [8, 32], strides = [1, 1]} : vector<8x96xf32> to vector<8x32xf32>
    %47 = vector.extract_strided_slice %45 {offsets = [0, 0], sizes = [8, 32], strides = [1, 1]} : vector<8x96xf32> to vector<8x32xf32>
    %48 = arith.addf %46, %47 : vector<8x32xf32>
    %49 = arith.negf %48 : vector<8x32xf32>
    %50 = math.exp %49 : vector<8x32xf32>
    %cst_30 = arith.constant 1.000000e+00 : f32
    %51 = vector.broadcast %cst_30 : f32 to vector<8x32xf32>
    %52 = arith.addf %51, %50 : vector<8x32xf32>
    %53 = arith.divf %51, %52 : vector<8x32xf32>
    %54 = vector.extract_strided_slice %40 {offsets = [0, 32], sizes = [8, 32], strides = [1, 1]} : vector<8x96xf32> to vector<8x32xf32>
    %55 = vector.extract_strided_slice %45 {offsets = [0, 32], sizes = [8, 32], strides = [1, 1]} : vector<8x96xf32> to vector<8x32xf32>
    %56 = arith.addf %54, %55 : vector<8x32xf32>
    %57 = arith.negf %56 : vector<8x32xf32>
    %58 = math.exp %57 : vector<8x32xf32>
    %cst_31 = arith.constant 1.000000e+00 : f32
    %59 = vector.broadcast %cst_31 : f32 to vector<8x32xf32>
    %60 = arith.addf %59, %58 : vector<8x32xf32>
    %61 = arith.divf %59, %60 : vector<8x32xf32>
    %62 = vector.extract_strided_slice %40 {offsets = [0, 64], sizes = [8, 32], strides = [1, 1]} : vector<8x96xf32> to vector<8x32xf32>
    %63 = vector.extract_strided_slice %45 {offsets = [0, 64], sizes = [8, 32], strides = [1, 1]} : vector<8x96xf32> to vector<8x32xf32>
    %64 = arith.mulf %53, %63 : vector<8x32xf32>
    %65 = arith.addf %62, %64 : vector<8x32xf32>
    %66 = math.tanh %65 : vector<8x32xf32>
    %cst_32 = arith.constant 1.000000e+00 : f32
    %67 = vector.broadcast %cst_32 : f32 to vector<8x32xf32>
    %68 = arith.subf %67, %61 : vector<8x32xf32>
    %69 = arith.mulf %68, %66 : vector<8x32xf32>
    %70 = arith.mulf %61, %5 : vector<8x32xf32>
    %71 = arith.addf %69, %70 : vector<8x32xf32>
    %c64 = arith.constant 64 : index
    %c0_33 = arith.constant 0 : index
    %72 = vector.load %arg5[%c64, %c0_33] : memref<96x96xf32, #tpu.memory_space<vmem>>, vector<32x16xf32>
    %cst_34 = arith.constant dense<0.000000e+00> : vector<8x16xf32>
    %73 = tpu.matmul %71, %72, %cst_34 {dimension_numbers = #tpu.dot_dimension_numbers<[1], [0], [0], [1], [0, 0, 1, 1], [], []>} : vector<8x32xf32>, vector<32x16xf32>, vector<8x16xf32> -> vector<8x16xf32>
    %c4 = arith.constant 4 : index
    %c0_35 = arith.constant 0 : index
    %74 = vector.load %arg6[%c4, %c0_35] : memref<8x128xf32, #tpu.memory_space<vmem>>, vector<1x16xf32>
    %75 = vector.broadcast %74 : vector<1x16xf32> to vector<8x16xf32>
    %76 = arith.addf %73, %75 : vector<8x16xf32>
    %cst_36 = arith.constant dense<0xFF800000> : vector<8xf32>
    %77 = vector.multi_reduction <maximumf>, %76, %cst_36 [1] : vector<8x16xf32> to vector<8xf32>
    %78 = vector.shape_cast %77 : vector<8xf32> to vector<8x1xf32>
    %79 = vector.broadcast %78 : vector<8x1xf32> to vector<8x16xf32>
    %80 = arith.subf %76, %79 : vector<8x16xf32>
    %81 = math.exp %80 : vector<8x16xf32>
    %cst_37 = arith.constant dense<0.000000e+00> : vector<8xf32>
    %82 = vector.multi_reduction <add>, %81, %cst_37 [1] : vector<8x16xf32> to vector<8xf32>
    %83 = vector.shape_cast %82 : vector<8xf32> to vector<8x1xf32>
    %84 = math.log %83 : vector<8x1xf32>
    %85 = arith.addf %84, %78 : vector<8x1xf32>
    %86 = vector.broadcast %85 : vector<8x1xf32> to vector<8x16xf32>
    %87 = arith.subf %76, %86 : vector<8x16xf32>
    %c0_38 = arith.constant 0 : index
    %c0_39 = arith.constant 0 : index
    %88 = vector.load %arg8[%c0_38, %c0_39] : memref<8x32xf32, #tpu.memory_space<vmem>>, vector<8x32xf32>
    tpu.vector_store %arg8[%c0_38, %c0_39], %71 {strides = array<i32>} : memref<8x32xf32, #tpu.memory_space<vmem>>, vector<8x32xf32>,
    %cst_40 = arith.constant 0.000000e+00 : f32
    %89 = vector.broadcast %cst_40 : f32 to vector<8x70xf32>
    %90 = tpu.concatenate %87, %71, %23, %89 in 1 : vector<8x16xf32>, vector<8x32xf32>, vector<8x10xf32>, vector<8x70xf32> -> vector<8x128xf32>
    %c0_41 = arith.constant 0 : index
    %c0_42 = arith.constant 0 : index
    %c0_43 = arith.constant 0 : index
    %91 = vector.load %arg7[%c0_41, %c0_42, %c0_43] : memref<1x8x128xf32, #tpu.memory_space<vmem>>, vector<1x8x128xf32>
    %92 = vector.shape_cast %91 : vector<1x8x128xf32> to vector<8x128xf32>
    %93 = vector.shape_cast %90 : vector<8x128xf32> to vector<1x8x128xf32>
    tpu.vector_store %arg7[%c0_41, %c0_42, %c0_43], %93 {strides = array<i32>} : memref<1x8x128xf32, #tpu.memory_space<vmem>>, vector<1x8x128xf32>,
    return
  }
  func.func @transform_0(%arg0: i32) -> (i32, i32, i32) {
    %c0_i32 = arith.constant 0 : i32
    %c0_i32_0 = arith.constant 0 : i32
    %c0_i32_1 = arith.constant 0 : i32
    return %arg0, %c0_i32, %c0_i32_0 : i32, i32, i32
  }
  func.func @transform_1(%arg0: i32) -> (i32, i32) {
    %c0_i32 = arith.constant 0 : i32
    %c0_i32_0 = arith.constant 0 : i32
    %c0_i32_1 = arith.constant 0 : i32
    return %c0_i32, %c0_i32_0 : i32, i32
  }
  func.func @transform_2(%arg0: i32) -> (i32, i32) {
    %c0_i32 = arith.constant 0 : i32
    %c0_i32_0 = arith.constant 0 : i32
    %c0_i32_1 = arith.constant 0 : i32
    return %c0_i32, %c0_i32_0 : i32, i32
  }
  func.func @transform_3(%arg0: i32) -> (i32, i32) {
    %c0_i32 = arith.constant 0 : i32
    %c0_i32_0 = arith.constant 0 : i32
    %c0_i32_1 = arith.constant 0 : i32
    return %c0_i32, %c0_i32_0 : i32, i32
  }
  func.func @transform_4(%arg0: i32) -> (i32, i32) {
    %c0_i32 = arith.constant 0 : i32
    %c0_i32_0 = arith.constant 0 : i32
    %c0_i32_1 = arith.constant 0 : i32
    return %c0_i32, %c0_i32_0 : i32, i32
  }
  func.func @transform_5(%arg0: i32) -> (i32, i32) {
    %c0_i32 = arith.constant 0 : i32
    %c0_i32_0 = arith.constant 0 : i32
    %c0_i32_1 = arith.constant 0 : i32
    return %c0_i32, %c0_i32_0 : i32, i32
  }
  func.func @transform_6(%arg0: i32) -> (i32, i32, i32) {
    %c0_i32 = arith.constant 0 : i32
    %c0_i32_0 = arith.constant 0 : i32
    %c0_i32_1 = arith.constant 0 : i32
    return %arg0, %c0_i32, %c0_i32_0 : i32, i32, i32
  }
}

</mosaic_0001>

<llo_original>
// kernel: attn_decoder_decode.1
$region0: #{attn_decoder_decode.1}
  #allocation0 [shape = 'u32[]', space=smem, size = 0x4, offset = 0x4, fixed_abs, tag = 'smem constant byte address 0x4 - core index']
  #allocation1 [shape = 'u32[144,128]{1,0:T(1,128)}', space=vmem, size = 0x12000, scoped, tag = 'internal scratch']
  #allocation2 [shape = 'f32[8,32]{1,0:T(8,128)}', space=vmem, size = 0x1000, scoped, tag = 'scratch operand']
  %s0 = inlined_call_operand.hbm [shape: f32[3,8,16], index: 0, kind: input, shape index: {}]
  %s1 = inlined_call_operand.hbm [shape: f32[8,32], index: 1, kind: input, shape index: {}]
  %s2 = inlined_call_operand.hbm [shape: f32[10,32], index: 2, kind: input, shape index: {}]
  %s3 = inlined_call_operand.hbm [shape: f32[48,256], index: 3, kind: input, shape index: {}]
  %s4 = inlined_call_operand.hbm [shape: f32[96,96], index: 4, kind: input, shape index: {}]
  %s5 = inlined_call_operand.vmem [shape: f32[8,128], index: 5, kind: input, shape index: {}]
  %s6 = inlined_call_operand.vmem [shape: f32[3,8,128], index: 6, kind: output, shape index: {}]
  %s7 = sld [smem:[#allocation0]]
  $region81: #{attn_decoder_decode.1} parent=0
    _
  %s9 = ssub.s32 1, %s7
  %s10 = scalar_select 0, %s9, %s7
  $region1: #{attn_decoder_decode.1} parent=0
    #allocation3 [shape = 'u8[8192]{0}', space=vmem, size = 0x2000, scoped, tag = 'input window, operand 0']
    #allocation4 [shape = 's32[2]{0}', space=sflag, size = 0x8, scoped, tag = 'scoped memory for attn_decoder_decode.1']
    #allocation5 [shape = 'u8[4096]{0}', space=vmem, size = 0x1000, scoped, tag = 'input window, operand 1, single buffered']
    #allocation6 [shape = 's32[1]{0}', space=sflag, size = 0x4, scoped, tag = 'scoped memory for attn_decoder_decode.1']
    #allocation7 [shape = 'u8[8192]{0}', space=vmem, size = 0x2000, scoped, tag = 'input window, operand 2, single buffered']
    #allocation8 [shape = 'u8[49152]{0}', space=vmem, size = 0xc000, scoped, tag = 'input window, operand 3, single buffered']
    #allocation9 [shape = 's32[1]{0}', space=sflag, size = 0x4, scoped, tag = 'scoped memory for attn_decoder_decode.1']
    #allocation10 [shape = 'u8[49152]{0}', space=vmem, size = 0xc000, scoped, tag = 'input window, operand 4, single buffered']
    %11 = vsyncpa [#allocation4], 0
    %s12 = scalar_lea.sflag [#allocation4], 1
    %13 = vsyncpa %s12, 0
    %14 = vsyncpa [#allocation6], 0
    %15 = vsyncpa [#allocation9], 0
    loop: start=0, step=1, limit=5
    $region2: #{attn_decoder_decode.1} parent=1 // loop_pre_header
      _
    $region3: #{attn_decoder_decode.1} parent=1 // loop_header
      %s17 = sphi 0, %s21
      %p18 = scmp.ge.s32.totalorder %s17, 5
      %s27 = sphi 0, %s29
      %s30 = sphi 0, %s27
      %s31 = sphi 0, %s30
      %s47 = sphi 0, %s31
      %s51 = sphi 0, %s51
      %s53 = sphi 0, %s51
      %s54 = sphi 0, %s53
      %s68 = sphi 0, %s54
      %s72 = sphi 0, %s72
      %s74 = sphi 0, %s72
      %s75 = sphi 0, %s74
      %s89 = sphi 0, %s75
      %s93 = sphi 0, %s93
      %s95 = sphi 0, %s93
      %s96 = sphi 0, %s95
      %s110 = sphi 0, %s96
      %s114 = sphi 0, %s114
      %s116 = sphi 0, %s114
      %s117 = sphi 0, %s116
      %s131 = sphi 0, %s117
      %s135 = sphi 0, %s135
      %s137 = sphi 0, %s135
      %s138 = sphi 0, %s137
      %s152 = sphi 0, %s138
      %s158 = sphi 0, %s160
      %s161 = sphi 0, %s158
      %s162 = sphi 0, %s161
      %s178 = sphi 0, %s162
    $region4: #{attn_decoder_decode.1} parent=1 // loop_header_branch
      %20 = sbr.rel (%p18) target = $region8
    $region5: #{attn_decoder_decode.1} parent=1 // loop_body
      %s22 = ssub.s32 %s17, 1
      %s23 = ssub.s32 %s17, 2
      %s24 = sadd.s32 %s17, 1
      %s25 = ssub.s32 %s17, %s24
      %p26 = scmp.eq.s32.totalorder %s25, 0
      %s28 = sadd.s32 %s27, 1
      %s29 = scalar_select %p26, %s27, %s28
      %p32 = pneg %p26
      %p33 = scmp.eq.s32.totalorder %s17, 2
      %p34 = por %p32, %p33
      %p35 = scmp.ne.s32.totalorder %s27, %s30
      %p36 = scmp.eq.s32.totalorder %s17, 0
      %p37 = por %p35, %p36
      %p38 = scmp.ne.s32.totalorder %s27, %s30
      %p39 = scmp.eq.s32.totalorder %s22, 2
      %p40 = por %p38, %p39
      %p41 = scmp.ne.s32.totalorder %s30, %s31
      %p42 = scmp.eq.s32.totalorder %s22, 0
      %p43 = por %p41, %p42
      %p44 = scmp.ne.s32.totalorder %s30, %s31
      %p45 = scmp.eq.s32.totalorder %s23, 2
      %p46 = por %p44, %p45
      %p48 = scmp.ne.s32.totalorder %s31, %s47
      %p49 = scmp.eq.s32.totalorder %s23, 0
      %p50 = por %p48, %p49
      %s52 = sadd.s32 %s51, 1
      %p55 = scmp.eq.s32.totalorder %s17, 2
      %p56 = scmp.ne.s32.totalorder %s51, %s53
      %p57 = scmp.eq.s32.totalorder %s17, 0
      %p58 = por %p56, %p57
      %p59 = scmp.ne.s32.totalorder %s51, %s53
      %p60 = scmp.eq.s32.totalorder %s22, 2
      %p61 = por %p59, %p60
      %p62 = scmp.ne.s32.totalorder %s53, %s54
      %p63 = scmp.eq.s32.totalorder %s22, 0
      %p64 = por %p62, %p63
      %p65 = scmp.ne.s32.totalorder %s53, %s54
      %p66 = scmp.eq.s32.totalorder %s23, 2
      %p67 = por %p65, %p66
      %p69 = scmp.ne.s32.totalorder %s54, %s68
      %p70 = scmp.eq.s32.totalorder %s23, 0
      %p71 = por %p69, %p70
      %s73 = sadd.s32 %s72, 1
      %p76 = scmp.eq.s32.totalorder %s17, 2
      %p77 = scmp.ne.s32.totalorder %s72, %s74
      %p78 = scmp.eq.s32.totalorder %s17, 0
      %p79 = por %p77, %p78
      %p80 = scmp.ne.s32.totalorder %s72, %s74
      %p81 = scmp.eq.s32.totalorder %s22, 2
      %p82 = por %p80, %p81
      %p83 = scmp.ne.s32.totalorder %s74, %s75
      %p84 = scmp.eq.s32.totalorder %s22, 0
      %p85 = por %p83, %p84
      %p86 = scmp.ne.s32.totalorder %s74, %s75
      %p87 = scmp.eq.s32.totalorder %s23, 2
      %p88 = por %p86, %p87
      %p90 = scmp.ne.s32.totalorder %s75, %s89
      %p91 = scmp.eq.s32.totalorder %s23, 0
      %p92 = por %p90, %p91
      %s94 = sadd.s32 %s93, 1
      %p97 = scmp.eq.s32.totalorder %s17, 2
      %p98 = scmp.ne.s32.totalorder %s93, %s95
      %p99 = scmp.eq.s32.totalorder %s17, 0
      %p100 = por %p98, %p99
      %p101 = scmp.ne.s32.totalorder %s93, %s95
      %p102 = scmp.eq.s32.totalorder %s22, 2
      %p103 = por %p101, %p102
      %p104 = scmp.ne.s32.totalorder %s95, %s96
      %p105 = scmp.eq.s32.totalorder %s22, 0
      %p106 = por %p104, %p105
      %p107 = scmp.ne.s32.totalorder %s95, %s96
      %p108 = scmp.eq.s32.totalorder %s23, 2
      %p109 = por %p107, %p108
      %p111 = scmp.ne.s32.totalorder %s96, %s110
      %p112 = scmp.eq.s32.totalorder %s23, 0
      %p113 = por %p111, %p112
      %s115 = sadd.s32 %s114, 1
      %p118 = scmp.eq.s32.totalorder %s17, 2
      %p119 = scmp.ne.s32.totalorder %s114, %s116
      %p120 = scmp.eq.s32.totalorder %s17, 0
      %p121 = por %p119, %p120
      %p122 = scmp.ne.s32.totalorder %s114, %s116
      %p123 = scmp.eq.s32.totalorder %s22, 2
      %p124 = por %p122, %p123
      %p125 = scmp.ne.s32.totalorder %s116, %s117
      %p126 = scmp.eq.s32.totalorder %s22, 0
      %p127 = por %p125, %p126
      %p128 = scmp.ne.s32.totalorder %s116, %s117
      %p129 = scmp.eq.s32.totalorder %s23, 2
      %p130 = por %p128, %p129
      %p132 = scmp.ne.s32.totalorder %s117, %s131
      %p133 = scmp.eq.s32.totalorder %s23, 0
      %p134 = por %p132, %p133
      %s136 = sadd.s32 %s135, 1
      %p139 = scmp.eq.s32.totalorder %s17, 2
      %p140 = scmp.ne.s32.totalorder %s135, %s137
      %p141 = scmp.eq.s32.totalorder %s17, 0
      %p142 = por %p140, %p141
      %p143 = scmp.ne.s32.totalorder %s135, %s137
      %p144 = scmp.eq.s32.totalorder %s22, 2
      %p145 = por %p143, %p144
      %p146 = scmp.ne.s32.totalorder %s137, %s138
      %p147 = scmp.eq.s32.totalorder %s22, 0
      %p148 = por %p146, %p147
      %p149 = scmp.ne.s32.totalorder %s137, %s138
      %p150 = scmp.eq.s32.totalorder %s23, 2
      %p151 = por %p149, %p150
      %p153 = scmp.ne.s32.totalorder %s138, %s152
      %p154 = scmp.eq.s32.totalorder %s23, 0
      %p155 = por %p153, %p154
      %s156 = ssub.s32 %s17, %s24
      %p157 = scmp.eq.s32.totalorder %s156, 0
      %s159 = sadd.s32 %s158, 1
      %s160 = scalar_select %p157, %s158, %s159
      %p163 = pneg %p157
      %p164 = scmp.eq.s32.totalorder %s17, 2
      %p165 = por %p163, %p164
      %p166 = scmp.ne.s32.totalorder %s158, %s161
      %p167 = scmp.eq.s32.totalorder %s17, 0
      %p168 = por %p166, %p167
      %p169 = scmp.ne.s32.totalorder %s158, %s161
      %p170 = scmp.eq.s32.totalorder %s22, 2
      %p171 = por %p169, %p170
      %p172 = scmp.ne.s32.totalorder %s161, %s162
      %p173 = scmp.eq.s32.totalorder %s22, 0
      %p174 = por %p172, %p173
      %p175 = scmp.ne.s32.totalorder %s161, %s162
      %p176 = scmp.eq.s32.totalorder %s23, 2
      %p177 = por %p175, %p176
      %p179 = scmp.ne.s32.totalorder %s162, %s178
      %p180 = scmp.eq.s32.totalorder %s23, 0
      %p181 = por %p179, %p180
      %p182 = scmp.le.s32.totalorder 1, %s17
      %p183 = scmp.lt.s32.totalorder %s17, 4
      %p184 = pnand %p182, %p183
      %p185 = pneg %p184
      // Predicated region
      $region9: #{attn_decoder_decode.1} parent=5 // pred_check
        _
      $region10: #{attn_decoder_decode.1} parent=5 // pred_check_branch
        %187 = sbr.rel (%p184) target = $region12
      $region11: #{attn_decoder_decode.1} parent=5 // pred_region
        %s188 = ssub.s32 %s17, 1
        // Predicated region
        $region13: #{attn_decoder_decode.1} parent=11 // pred_check
          %p189 = pneg %p64
        $region14: #{attn_decoder_decode.1} parent=11 // pred_check_branch
          %191 = sbr.rel (%p189) target = $region16
        $region15: #{attn_decoder_decode.1} parent=11 // pred_region
          %s193 = ssub.s32 128, 128
          %194 = vsyncadd [#allocation6], %s193
          %s196 = sshll.u32 [#allocation5], 4
          %s197 = int_to_ptr.vmem [resolvable:$true] %s196
          %199 = dma.hbm_to_vmem [thread:$0]  %s1, 128, %s197, [#allocation6]
        $region16: #{attn_decoder_decode.1} parent=11 // pred_fallthru
          _
        // Predicated region
        $region17: #{attn_decoder_decode.1} parent=11 // pred_check
          %p200 = pneg %p85
        $region18: #{attn_decoder_decode.1} parent=11 // pred_check_branch
          %202 = sbr.rel (%p200) target = $region20
        $region19: #{attn_decoder_decode.1} parent=11 // pred_region
          %s204 = ssub.s32 256, 256
          %205 = vsyncadd [#allocation6], %s204
          %s206 = sshll.u32 [#allocation7], 4
          %s207 = int_to_ptr.vmem [resolvable:$true] %s206
          %212 = dma.hbm_to_vmem [thread:$0]  %s2, 256, %s207, [#allocation6], 128, 128, 8
        $region20: #{attn_decoder_decode.1} parent=11 // pred_fallthru
          _
        // Predicated region
        $region21: #{attn_decoder_decode.1} parent=11 // pred_check
          %p213 = pneg %p106
        $region22: #{attn_decoder_decode.1} parent=11 // pred_check_branch
          %215 = sbr.rel (%p213) target = $region24
        $region23: #{attn_decoder_decode.1} parent=11 // pred_region
          %s217 = ssub.s32 1536, 1536
          %218 = vsyncadd [#allocation9], %s217
          %s219 = sshll.u32 [#allocation8], 4
          %s220 = int_to_ptr.vmem [resolvable:$true] %s219
          %225 = dma.hbm_to_vmem [thread:$0]  %s3, 1536, %s220, [#allocation9], 256, 256, 16
        $region24: #{attn_decoder_decode.1} parent=11 // pred_fallthru
          _
        // Predicated region
        $region25: #{attn_decoder_decode.1} parent=11 // pred_check
          %p226 = pneg %p127
        $region26: #{attn_decoder_decode.1} parent=11 // pred_check_branch
          %228 = sbr.rel (%p226) target = $region28
        $region27: #{attn_decoder_decode.1} parent=11 // pred_region
          %s230 = ssub.s32 1536, 1536
          %231 = vsyncadd [#allocation9], %s230
          %s232 = sshll.u32 [#allocation10], 4
          %s233 = int_to_ptr.vmem [resolvable:$true] %s232
          %238 = dma.hbm_to_vmem [thread:$0]  %s4, 1536, %s233, [#allocation9], 128, 128, 8
        $region28: #{attn_decoder_decode.1} parent=11 // pred_fallthru
          _
        // Predicated region
        $region29: #{attn_decoder_decode.1} parent=11 // pred_check
          %p239 = pneg %p148
        $region30: #{attn_decoder_decode.1} parent=11 // pred_check_branch
          %241 = sbr.rel (%p239) target = $region32
        $region31: #{attn_decoder_decode.1} parent=11 // pred_region
          _
        $region32: #{attn_decoder_decode.1} parent=11 // pred_fallthru
          _
      $region12: #{attn_decoder_decode.1} parent=5 // pred_fallthru
        _
      %p242 = scmp.lt.s32.totalorder %s17, 3
      // Predicated region
      $region33: #{attn_decoder_decode.1} parent=5 // pred_check
        %p243 = pneg %p242
      $region34: #{attn_decoder_decode.1} parent=5 // pred_check_branch
        %245 = sbr.rel (%p243) target = $region36
      $region35: #{attn_decoder_decode.1} parent=5 // pred_region
        // Predicated region
        $region37: #{attn_decoder_decode.1} parent=35 // pred_check
          %p246 = pneg %p37
        $region38: #{attn_decoder_decode.1} parent=35 // pred_check_branch
          %248 = sbr.rel (%p246) target = $region40
        $region39: #{attn_decoder_decode.1} parent=35 // pred_region
          %s249 = sand.u32 %s27, 1
          %s250 = scalar_lea.sflag [#allocation4], %s249
          %s251 = sand.u32 %s27, 1
          %s252 = smul.addr %s251, 8
          %s253 = scalar_lea.vmem [#allocation3], %s252
          %s255 = ssub.s32 128, 128
          %256 = vsyncadd %s250, %s255
          %s257 = smul.addr %s17, 128
          %s258 = scalar_lea.hbm %s0, %s257
          %s260 = sshll.u32 %s253, 4
          %s261 = int_to_ptr.vmem [resolvable:$true] %s260
          %263 = dma.hbm_to_vmem [thread:$0]  %s258, 128, %s261, %s250
        $region40: #{attn_decoder_decode.1} parent=35 // pred_fallthru
          _
      $region36: #{attn_decoder_decode.1} parent=5 // pred_fallthru
        _
      %p264 = scmp.le.s32.totalorder 1, %s17
      %p265 = scmp.lt.s32.totalorder %s17, 4
      %p266 = pnand %p264, %p265
      %p267 = pneg %p266
      // Predicated region
      $region41: #{attn_decoder_decode.1} parent=5 // pred_check
        _
      $region42: #{attn_decoder_decode.1} parent=5 // pred_check_branch
        %269 = sbr.rel (%p266) target = $region44
      $region43: #{attn_decoder_decode.1} parent=5 // pred_region
        %s270 = ssub.s32 %s17, 1
        %s271 = sand.u32 %s30, 1
        %s272 = scalar_lea.sflag [#allocation4], %s271
        %s273 = sand.u32 %s30, 1
        %s274 = smul.addr %s273, 8
        %s275 = scalar_lea.vmem [#allocation3], %s274
        // Predicated region
        $region45: #{attn_decoder_decode.1} parent=43 // pred_check
          %p276 = pneg %p43
        $region46: #{attn_decoder_decode.1} parent=43 // pred_check_branch
          %278 = sbr.rel (%p276) target = $region48
        $region47: #{attn_decoder_decode.1} parent=43 // pred_region
          %279 = dma.done %s272, 128
        $region48: #{attn_decoder_decode.1} parent=43 // pred_fallthru
          _
        // Predicated region
        $region49: #{attn_decoder_decode.1} parent=43 // pred_check
          %p280 = pneg %p64
        $region50: #{attn_decoder_decode.1} parent=43 // pred_check_branch
          %282 = sbr.rel (%p280) target = $region52
        $region51: #{attn_decoder_decode.1} parent=43 // pred_region
          %283 = dma.done [#allocation6], 128
        $region52: #{attn_decoder_decode.1} parent=43 // pred_fallthru
          _
        // Predicated region
        $region53: #{attn_decoder_decode.1} parent=43 // pred_check
          %p284 = pneg %p85
        $region54: #{attn_decoder_decode.1} parent=43 // pred_check_branch
          %286 = sbr.rel (%p284) target = $region56
        $region55: #{attn_decoder_decode.1} parent=43 // pred_region
          %287 = dma.done [#allocation6], 256
        $region56: #{attn_decoder_decode.1} parent=43 // pred_fallthru
          _
        // Predicated region
        $region57: #{attn_decoder_decode.1} parent=43 // pred_check
          %p288 = pneg %p106
        $region58: #{attn_decoder_decode.1} parent=43 // pred_check_branch
          %290 = sbr.rel (%p288) target = $region60
        $region59: #{attn_decoder_decode.1} parent=43 // pred_region
          %291 = dma.done [#allocation9], 1536
        $region60: #{attn_decoder_decode.1} parent=43 // pred_fallthru
          _
        // Predicated region
        $region61: #{attn_decoder_decode.1} parent=43 // pred_check
          %p292 = pneg %p127
        $region62: #{attn_decoder_decode.1} parent=43 // pred_check_branch
          %294 = sbr.rel (%p292) target = $region64
        $region63: #{attn_decoder_decode.1} parent=43 // pred_region
          %295 = dma.done [#allocation9], 1536
        $region64: #{attn_decoder_decode.1} parent=43 // pred_fallthru
          _
        %s296 = sand.u32 %s30, 1
        %s297 = scalar_lea.sflag [#allocation4], %s296
        %s298 = sand.u32 %s30, 1
        %s299 = smul.addr %s298, 8
        %s300 = scalar_lea.vmem [#allocation3], %s299
        %p301 = pneg %p43
        %p302 = pneg %p40
        %p303 = pneg %p64
        %p304 = pneg %p61
        %p305 = pneg %p85
        %p306 = pneg %p82
        %p307 = pneg %p106
        %p308 = pneg %p103
        %p309 = pneg %p127
        %p310 = pneg %p124
        %p311 = pneg %p148
        %p312 = pneg %p145
        %p313 = pneg %p174
        %p314 = pneg %p171
        %p315 = scmp.lt.s32.totalorder %s22, 2
        %s316 = scalar_select %p315, %s22, 2
        %s317 = smul.addr %s316, 8
        %s318 = scalar_lea.vmem %s6, %s317
        %p319 = scmp.lt.s32.totalorder %s22, 2
        %s320 = scalar_select %p319, %s22, 2
        %s321 = smul.addr %s320, 8
        %s322 = scalar_lea.vmem %s6, %s321
        %p323 = scmp.eq.s32.totalorder %s22, 0
        // Predicated region
        $region65: #{attn_decoder_decode.1} parent=43 // pred_check
          %p324 = pneg %p323
        $region66: #{attn_decoder_decode.1} parent=43 // pred_check_branch
          %326 = sbr.rel (%p324) target = $region68
        $region67: #{attn_decoder_decode.1} parent=43 // pred_region
          %v327 = vld [vmem:[#allocation5] sm:$0xff]
          %vm328 = vcmask 261120
          %329 = vst.msk [vmem:[#allocation2] sm:$0xff] %vm328, %v327
        $region68: #{attn_decoder_decode.1} parent=43 // pred_fallthru
          _
        %v330 = vld [vmem:[%s275] sm:$0xff]
        %v331 = vld [vmem:[#allocation2] sm:$0xff]
        %v332 = vld [vmem:[#allocation8] sm:$0xff]
        %v333 = vld [vmem:[#allocation8 + $0x10] sm:$0xff]
        %v334 = vld [vmem:[#allocation8 + $0x20] sm:$0xff]
        %v335 = vld [vmem:[#allocation8 + $0x30] sm:$0xff]
        %v336 = vld [vmem:[#allocation8 + $0x40] sm:$0xff]
        %v337 = vld [vmem:[#allocation8 + $0x50] sm:$0xff]
        %vm338 = vcmask 261120
        %v340 = vsel %vm338, %v331, 0
        %342 = vmatprep.subr.mxu0 0.0
        %343 = vmatpush1.msra.mxu0 %v334
        %344 = vmatprep.subr.mxu0 0.0
        %345 = vmatpush1.msra.mxu0 %v335
        %346 = vmatprep.subr.mxu0 0.0
        %347 = vmatpush1.msra.mxu0 %v336
        %348 = vmatprep.subr.mxu0 0.0
        %349 = vmatpush1.msra.mxu0 %v337
        %350 = vmatprep.subr.mxu0 0.0
        %351 = vmatpush1.msra.mxu0 0.0
        %352 = vmatprep.subr.mxu0 0.0
        %353 = vmatpush1.msra.mxu0 0.0
        %354 = vmatprep.subr.mxu0 0.0
        %355 = vmatpush1.msra.mxu0 0.0
        %356 = vmatprep.subr.mxu0 0.0
        %357 = vmatpush1.msra.mxu0 0.0
        %358 = vmatprep.subr.mxu0 0.0
        %359 = vmatpush1.msra.mxu0 0.0
        %360 = vmatprep.subr.mxu0 0.0
        %361 = vmatpush1.msra.mxu0 0.0
        %362 = vmatprep.subr.mxu0 0.0
        %363 = vmatpush1.msra.mxu0 0.0
        %364 = vmatprep.subr.mxu0 0.0
        %365 = vmatpush1.msra.mxu0 0.0
        %366 = vmatprep.subr.mxu0 0.0
        %367 = vmatpush1.msra.mxu0 0.0
        %368 = vmatprep.subr.mxu0 0.0
        %369 = vmatpush1.msra.mxu0 0.0
        %370 = vmatprep.subr.mxu0 0.0
        %371 = vmatpush1.msra.mxu0 0.0
        %372 = vmatprep.subr.mxu0 0.0
        %373 = vmatpush1.msra.mxu0 0.0
        %374 = vmatprep.subr.mxu0 0.0
        %375 = vmatpush1.msra.mxu0 0.0
        %376 = vmatprep.subr.mxu0 0.0
        %377 = vmatpush1.msra.mxu0 0.0
        %378 = vmatprep.subr.mxu0 0.0
        %379 = vmatpush1.msra.mxu0 0.0
        %380 = vmatprep.subr.mxu0 0.0
        %381 = vmatpush1.msra.mxu0 0.0
        %382 = vmatprep.subr.mxu0 0.0
        %383 = vmatpush1.msra.mxu0 0.0
        %384 = vmatprep.subr.mxu0 0.0
        %385 = vmatpush1.msra.mxu0 0.0
        %386 = vmatprep.subr.mxu0 0.0
        %387 = vmatpush1.msra.mxu0 0.0
        %388 = vmatprep.subr.mxu0 0.0
        %389 = vmatpush1.msra.mxu0 0.0
        %390 = vmatprep.subr.mxu0 0.0
        %391 = vmatpush1.msra.mxu0 0.0
        %392 = vmatprep.subr.mxu0 0.0
        %393 = vmatpush1.msra.mxu0 0.0
        %394 = vmatprep.subr.mxu0 0.0
        %395 = vmatpush1.msra.mxu0 0.0
        %396 = vmatprep.subr.mxu0 0.0
        %397 = vmatpush1.msra.mxu0 0.0
        %398 = vmatprep.subr.mxu0 0.0
        %399 = vmatpush1.msra.mxu0 0.0
        %400 = vmatprep.subr.mxu0 0.0
        %401 = vmatpush1.msra.mxu0 0.0
        %402 = vmatprep.subr.mxu0 0.0
        %403 = vmatpush1.msra.mxu0 0.0
        %404 = vmatprep.subr.mxu0 0.0
        %405 = vmatpush1.msra.mxu0 0.0
        %406 = vmatprep.mubr.f32.mxu0 0.0
        %407 = vmatmul.mubr.f32.gmra.mrb[0].mxu0 %v340
        %v408 = vpop.f32.mrb[0].mxu0
        %v409 = vadd.f32 0.0, %v408
        %v410 = vpop.f32.mrb[0].mxu0
        %411 = vdwg.mxu0
        %vm412 = vcmask 130048
        %v414 = vsel %vm412, %v330, 0
        %416 = vmatprep.subr.mxu0 0.0
        %417 = vmatpush1.msra.mxu0 %v332
        %418 = vmatprep.subr.mxu0 0.0
        %419 = vmatpush1.msra.mxu0 %v333
        %420 = vmatprep.subr.mxu0 0.0
        %421 = vmatpush1.msra.mxu0 0.0
        %422 = vmatprep.subr.mxu0 0.0
        %423 = vmatpush1.msra.mxu0 0.0
        %424 = vmatprep.subr.mxu0 0.0
        %425 = vmatpush1.msra.mxu0 0.0
        %426 = vmatprep.subr.mxu0 0.0
        %427 = vmatpush1.msra.mxu0 0.0
        %428 = vmatprep.subr.mxu0 0.0
        %429 = vmatpush1.msra.mxu0 0.0
        %430 = vmatprep.subr.mxu0 0.0
        %431 = vmatpush1.msra.mxu0 0.0
        %432 = vmatprep.subr.mxu0 0.0
        %433 = vmatpush1.msra.mxu0 0.0
        %434 = vmatprep.subr.mxu0 0.0
        %435 = vmatpush1.msra.mxu0 0.0
        %436 = vmatprep.subr.mxu0 0.0
        %437 = vmatpush1.msra.mxu0 0.0
        %438 = vmatprep.subr.mxu0 0.0
        %439 = vmatpush1.msra.mxu0 0.0
        %440 = vmatprep.subr.mxu0 0.0
        %441 = vmatpush1.msra.mxu0 0.0
        %442 = vmatprep.subr.mxu0 0.0
        %443 = vmatpush1.msra.mxu0 0.0
        %444 = vmatprep.subr.mxu0 0.0
        %445 = vmatpush1.msra.mxu0 0.0
        %446 = vmatprep.subr.mxu0 0.0
        %447 = vmatpush1.msra.mxu0 0.0
        %448 = vmatprep.subr.mxu0 0.0
        %449 = vmatpush1.msra.mxu0 0.0
        %450 = vmatprep.subr.mxu0 0.0
        %451 = vmatpush1.msra.mxu0 0.0
        %452 = vmatprep.subr.mxu0 0.0
        %453 = vmatpush1.msra.mxu0 0.0
        %454 = vmatprep.subr.mxu0 0.0
        %455 = vmatpush1.msra.mxu0 0.0
        %456 = vmatprep.subr.mxu0 0.0
        %457 = vmatpush1.msra.mxu0 0.0
        %458 = vmatprep.subr.mxu0 0.0
        %459 = vmatpush1.msra.mxu0 0.0
        %460 = vmatprep.subr.mxu0 0.0
        %461 = vmatpush1.msra.mxu0 0.0
        %462 = vmatprep.subr.mxu0 0.0
        %463 = vmatpush1.msra.mxu0 0.0
        %464 = vmatprep.subr.mxu0 0.0
        %465 = vmatpush1.msra.mxu0 0.0
        %466 = vmatprep.subr.mxu0 0.0
        %467 = vmatpush1.msra.mxu0 0.0
        %468 = vmatprep.subr.mxu0 0.0
        %469 = vmatpush1.msra.mxu0 0.0
        %470 = vmatprep.subr.mxu0 0.0
        %471 = vmatpush1.msra.mxu0 0.0
        %472 = vmatprep.subr.mxu0 0.0
        %473 = vmatpush1.msra.mxu0 0.0
        %474 = vmatprep.subr.mxu0 0.0
        %475 = vmatpush1.msra.mxu0 0.0
        %476 = vmatprep.subr.mxu0 0.0
        %477 = vmatpush1.msra.mxu0 0.0
        %478 = vmatprep.subr.mxu0 0.0
        %479 = vmatpush1.msra.mxu0 0.0
        %480 = vmatprep.mubr.f32.mxu0 0.0
        %481 = vmatmul.mubr.f32.gmra.mrb[0].mxu0 %v414
        %v482 = vpop.f32.mrb[0].mxu0
        %v483 = vadd.f32 %v409, %v482
        %v484 = vpop.f32.mrb[0].mxu0
        %485 = vdwg.mxu0
        %v486 = vld [vmem:[%s5] sm:$0x1]
        %v487 = vlaneseq
        %v488 = vshrl.u32 %v487, 7
        %v489 = vsub.s32 0, %v488
        %v490 = vrot.slane %v486, %v489
        %v491 = vadd.f32 %v483, %v490
        %vm492 = vcmask 80896
        %v493 = vsel %vm492, %v491, -inf
        %494 = vmax.xlane.f32.xlu0 %v493
        %v495 = vpop.xlane.xlu0 %494
        %v496 = vsub.f32 %v491, %v495
        %v497 = vmul.f32 %v496, 1.442695
        %v498 = vpow.pop %v497
        %v499 = vsel %vm492, %v498, 0.0
        %500 = vadd.xlane.f32.xlu0 %v499
        %v501 = vpop.xlane.xlu0 %500
        %v502 = vrcp.pop %v501
        %v503 = vmul.f32 %v498, %v502
        %v504 = vld [vmem:[#allocation7] sm:$0xff]
        %v505 = vld [vmem:[#allocation7 + $0x8] sm:$0x3]
        %v507 = vsel %vm492, %v503, 0
        %vm509 = vcmask 1041408
        %v511 = vsel %vm509, %v505, 0
        %513 = vmatprep.subr.mxu0 0.0
        %514 = vmatpush1.msra.mxu0 %v504
        %515 = vmatprep.subr.mxu0 0.0
        %516 = vmatpush1.msra.mxu0 %v511
        %517 = vmatprep.subr.mxu0 0.0
        %518 = vmatpush1.msra.mxu0 0.0
        %519 = vmatprep.subr.mxu0 0.0
        %520 = vmatpush1.msra.mxu0 0.0
        %521 = vmatprep.subr.mxu0 0.0
        %522 = vmatpush1.msra.mxu0 0.0
        %523 = vmatprep.subr.mxu0 0.0
        %524 = vmatpush1.msra.mxu0 0.0
        %525 = vmatprep.subr.mxu0 0.0
        %526 = vmatpush1.msra.mxu0 0.0
        %527 = vmatprep.subr.mxu0 0.0
        %528 = vmatpush1.msra.mxu0 0.0
        %529 = vmatprep.subr.mxu0 0.0
        %530 = vmatpush1.msra.mxu0 0.0
        %531 = vmatprep.subr.mxu0 0.0
        %532 = vmatpush1.msra.mxu0 0.0
        %533 = vmatprep.subr.mxu0 0.0
        %534 = vmatpush1.msra.mxu0 0.0
        %535 = vmatprep.subr.mxu0 0.0
        %536 = vmatpush1.msra.mxu0 0.0
        %537 = vmatprep.subr.mxu0 0.0
        %538 = vmatpush1.msra.mxu0 0.0
        %539 = vmatprep.subr.mxu0 0.0
        %540 = vmatpush1.msra.mxu0 0.0
        %541 = vmatprep.subr.mxu0 0.0
        %542 = vmatpush1.msra.mxu0 0.0
        %543 = vmatprep.subr.mxu0 0.0
        %544 = vmatpush1.msra.mxu0 0.0
        %545 = vmatprep.subr.mxu0 0.0
        %546 = vmatpush1.msra.mxu0 0.0
        %547 = vmatprep.subr.mxu0 0.0
        %548 = vmatpush1.msra.mxu0 0.0
        %549 = vmatprep.subr.mxu0 0.0
        %550 = vmatpush1.msra.mxu0 0.0
        %551 = vmatprep.subr.mxu0 0.0
        %552 = vmatpush1.msra.mxu0 0.0
        %553 = vmatprep.subr.mxu0 0.0
        %554 = vmatpush1.msra.mxu0 0.0
        %555 = vmatprep.subr.mxu0 0.0
        %556 = vmatpush1.msra.mxu0 0.0
        %557 = vmatprep.subr.mxu0 0.0
        %558 = vmatpush1.msra.mxu0 0.0
        %559 = vmatprep.subr.mxu0 0.0
        %560 = vmatpush1.msra.mxu0 0.0
        %561 = vmatprep.subr.mxu0 0.0
        %562 = vmatpush1.msra.mxu0 0.0
        %563 = vmatprep.subr.mxu0 0.0
        %564 = vmatpush1.msra.mxu0 0.0
        %565 = vmatprep.subr.mxu0 0.0
        %566 = vmatpush1.msra.mxu0 0.0
        %567 = vmatprep.subr.mxu0 0.0
        %568 = vmatpush1.msra.mxu0 0.0
        %569 = vmatprep.subr.mxu0 0.0
        %570 = vmatpush1.msra.mxu0 0.0
        %571 = vmatprep.subr.mxu0 0.0
        %572 = vmatpush1.msra.mxu0 0.0
        %573 = vmatprep.subr.mxu0 0.0
        %574 = vmatpush1.msra.mxu0 0.0
        %575 = vmatprep.subr.mxu0 0.0
        %576 = vmatpush1.msra.mxu0 0.0
        %577 = vmatprep.mubr.f32.mxu0 0.0
        %578 = vmatmul.mubr.f32.gmra.mrb[0].mxu0 %v507
        %v579 = vpop.f32.mrb[0].mxu0
        %v580 = vadd.f32 0.0, %v579
        %v581 = vpop.f32.mrb[0].mxu0
        %582 = vdwg.mxu0
        %v583 = vld [vmem:[#allocation8 + $0x8] sm:$0xff]
        %v584 = vld [vmem:[#allocation8 + $0x18] sm:$0xff]
        %v585 = vld [vmem:[#allocation8 + $0x28] sm:$0xff]
        %v586 = vld [vmem:[#allocation8 + $0x38] sm:$0xff]
        %v587 = vld [vmem:[#allocation8 + $0x48] sm:$0xff]
        %v588 = vld [vmem:[#allocation8 + $0x58] sm:$0xff]
        %v590 = vsel %vm338, %v580, 0
        %592 = vmatprep.subr.mxu0 0.0
        %593 = vmatpush1.msra.mxu0 %v585
        %594 = vmatprep.subr.mxu0 0.0
        %595 = vmatpush1.msra.mxu0 %v586
        %596 = vmatprep.subr.mxu0 0.0
        %597 = vmatpush1.msra.mxu0 %v587
        %598 = vmatprep.subr.mxu0 0.0
        %599 = vmatpush1.msra.mxu0 %v588
        %600 = vmatprep.subr.mxu0 0.0
        %601 = vmatpush1.msra.mxu0 0.0
        %602 = vmatprep.subr.mxu0 0.0
        %603 = vmatpush1.msra.mxu0 0.0
        %604 = vmatprep.subr.mxu0 0.0
        %605 = vmatpush1.msra.mxu0 0.0
        %606 = vmatprep.subr.mxu0 0.0
        %607 = vmatpush1.msra.mxu0 0.0
        %608 = vmatprep.subr.mxu0 0.0
        %609 = vmatpush1.msra.mxu0 0.0
        %610 = vmatprep.subr.mxu0 0.0
        %611 = vmatpush1.msra.mxu0 0.0
        %612 = vmatprep.subr.mxu0 0.0
        %613 = vmatpush1.msra.mxu0 0.0
        %614 = vmatprep.subr.mxu0 0.0
        %615 = vmatpush1.msra.mxu0 0.0
        %616 = vmatprep.subr.mxu0 0.0
        %617 = vmatpush1.msra.mxu0 0.0
        %618 = vmatprep.subr.mxu0 0.0
        %619 = vmatpush1.msra.mxu0 0.0
        %620 = vmatprep.subr.mxu0 0.0
        %621 = vmatpush1.msra.mxu0 0.0
        %622 = vmatprep.subr.mxu0 0.0
        %623 = vmatpush1.msra.mxu0 0.0
        %624 = vmatprep.subr.mxu0 0.0
        %625 = vmatpush1.msra.mxu0 0.0
        %626 = vmatprep.subr.mxu0 0.0
        %627 = vmatpush1.msra.mxu0 0.0
        %628 = vmatprep.subr.mxu0 0.0
        %629 = vmatpush1.msra.mxu0 0.0
        %630 = vmatprep.subr.mxu0 0.0
        %631 = vmatpush1.msra.mxu0 0.0
        %632 = vmatprep.subr.mxu0 0.0
        %633 = vmatpush1.msra.mxu0 0.0
        %634 = vmatprep.subr.mxu0 0.0
        %635 = vmatpush1.msra.mxu0 0.0
        %636 = vmatprep.subr.mxu0 0.0
        %637 = vmatpush1.msra.mxu0 0.0
        %638 = vmatprep.subr.mxu0 0.0
        %639 = vmatpush1.msra.mxu0 0.0
        %640 = vmatprep.subr.mxu0 0.0
        %641 = vmatpush1.msra.mxu0 0.0
        %642 = vmatprep.subr.mxu0 0.0
        %643 = vmatpush1.msra.mxu0 0.0
        %644 = vmatprep.subr.mxu0 0.0
        %645 = vmatpush1.msra.mxu0 0.0
        %646 = vmatprep.subr.mxu0 0.0
        %647 = vmatpush1.msra.mxu0 0.0
        %648 = vmatprep.subr.mxu0 0.0
        %649 = vmatpush1.msra.mxu0 0.0
        %650 = vmatprep.subr.mxu0 0.0
        %651 = vmatpush1.msra.mxu0 0.0
        %652 = vmatprep.subr.mxu0 0.0
        %653 = vmatpush1.msra.mxu0 0.0
        %654 = vmatprep.subr.mxu0 0.0
        %655 = vmatpush1.msra.mxu0 0.0
        %656 = vmatprep.mubr.f32.mxu0 0.0
        %657 = vmatmul.mubr.f32.gmra.mrb[0].mxu0 %v590
        %v658 = vpop.f32.mrb[0].mxu0
        %v659 = vadd.f32 0.0, %v658
        %v660 = vpop.f32.mrb[0].mxu0
        %661 = vdwg.mxu0
        %662 = vmatprep.subr.mxu0 0.0
        %663 = vmatpush1.msra.mxu0 %v583
        %664 = vmatprep.subr.mxu0 0.0
        %665 = vmatpush1.msra.mxu0 %v584
        %666 = vmatprep.subr.mxu0 0.0
        %667 = vmatpush1.msra.mxu0 0.0
        %668 = vmatprep.subr.mxu0 0.0
        %669 = vmatpush1.msra.mxu0 0.0
        %670 = vmatprep.subr.mxu0 0.0
        %671 = vmatpush1.msra.mxu0 0.0
        %672 = vmatprep.subr.mxu0 0.0
        %673 = vmatpush1.msra.mxu0 0.0
        %674 = vmatprep.subr.mxu0 0.0
        %675 = vmatpush1.msra.mxu0 0.0
        %676 = vmatprep.subr.mxu0 0.0
        %677 = vmatpush1.msra.mxu0 0.0
        %678 = vmatprep.subr.mxu0 0.0
        %679 = vmatpush1.msra.mxu0 0.0
        %680 = vmatprep.subr.mxu0 0.0
        %681 = vmatpush1.msra.mxu0 0.0
        %682 = vmatprep.subr.mxu0 0.0
        %683 = vmatpush1.msra.mxu0 0.0
        %684 = vmatprep.subr.mxu0 0.0
        %685 = vmatpush1.msra.mxu0 0.0
        %686 = vmatprep.subr.mxu0 0.0
        %687 = vmatpush1.msra.mxu0 0.0
        %688 = vmatprep.subr.mxu0 0.0
        %689 = vmatpush1.msra.mxu0 0.0
        %690 = vmatprep.subr.mxu0 0.0
        %691 = vmatpush1.msra.mxu0 0.0
        %692 = vmatprep.subr.mxu0 0.0
        %693 = vmatpush1.msra.mxu0 0.0
        %694 = vmatprep.subr.mxu0 0.0
        %695 = vmatpush1.msra.mxu0 0.0
        %696 = vmatprep.subr.mxu0 0.0
        %697 = vmatpush1.msra.mxu0 0.0
        %698 = vmatprep.subr.mxu0 0.0
        %699 = vmatpush1.msra.mxu0 0.0
        %700 = vmatprep.subr.mxu0 0.0
        %701 = vmatpush1.msra.mxu0 0.0
        %702 = vmatprep.subr.mxu0 0.0
        %703 = vmatpush1.msra.mxu0 0.0
        %704 = vmatprep.subr.mxu0 0.0
        %705 = vmatpush1.msra.mxu0 0.0
        %706 = vmatprep.subr.mxu0 0.0
        %707 = vmatpush1.msra.mxu0 0.0
        %708 = vmatprep.subr.mxu0 0.0
        %709 = vmatpush1.msra.mxu0 0.0
        %710 = vmatprep.subr.mxu0 0.0
        %711 = vmatpush1.msra.mxu0 0.0
        %712 = vmatprep.subr.mxu0 0.0
        %713 = vmatpush1.msra.mxu0 0.0
        %714 = vmatprep.subr.mxu0 0.0
        %715 = vmatpush1.msra.mxu0 0.0
        %716 = vmatprep.subr.mxu0 0.0
        %717 = vmatpush1.msra.mxu0 0.0
        %718 = vmatprep.subr.mxu0 0.0
        %719 = vmatpush1.msra.mxu0 0.0
        %720 = vmatprep.subr.mxu0 0.0
        %721 = vmatpush1.msra.mxu0 0.0
        %722 = vmatprep.subr.mxu0 0.0
        %723 = vmatpush1.msra.mxu0 0.0
        %724 = vmatprep.subr.mxu0 0.0
        %725 = vmatpush1.msra.mxu0 0.0
        %726 = vmatprep.mubr.f32.mxu0 0.0
        %727 = vmatmul.mubr.f32.gmra.mrb[0].mxu0 %v414
        %v728 = vpop.f32.mrb[0].mxu0
        %v729 = vadd.f32 %v659, %v728
        %v730 = vpop.f32.mrb[0].mxu0
        %731 = vdwg.mxu0
        %v732 = vld [vmem:[%s5 + $0x1] sm:$0x1]
        %v733 = vlaneseq
        %v734 = vshrl.u32 %v733, 7
        %v735 = vsub.s32 0, %v734
        %v736 = vrot.slane %v732, %v735
        %v737 = vadd.f32 %v729, %v736
        %v738 = vmax.f32 %v737, 0.0
        %v739 = vld [vmem:[#allocation10] sm:$0xff]
        %v740 = vld [vmem:[#allocation10 + $0x8] sm:$0xff]
        %v741 = vld [vmem:[#allocation10 + $0x10] sm:$0xff]
        %v742 = vld [vmem:[#allocation10 + $0x18] sm:$0xff]
        %v743 = vld [vmem:[%s5 + $0x2] sm:$0x1]
        %v744 = vlaneseq
        %v745 = vshrl.u32 %v744, 7
        %v746 = vsub.s32 0, %v745
        %v747 = vrot.slane %v743, %v746
        %v749 = vsel %vm338, %v738, 0
        %751 = vmatprep.subr.mxu0 0.0
        %752 = vmatpush1.msra.mxu0 %v739
        %753 = vmatprep.subr.mxu0 0.0
        %754 = vmatpush1.msra.mxu0 %v740
        %755 = vmatprep.subr.mxu0 0.0
        %756 = vmatpush1.msra.mxu0 %v741
        %757 = vmatprep.subr.mxu0 0.0
        %758 = vmatpush1.msra.mxu0 %v742
        %759 = vmatprep.subr.mxu0 0.0
        %760 = vmatpush1.msra.mxu0 0.0
        %761 = vmatprep.subr.mxu0 0.0
        %762 = vmatpush1.msra.mxu0 0.0
        %763 = vmatprep.subr.mxu0 0.0
        %764 = vmatpush1.msra.mxu0 0.0
        %765 = vmatprep.subr.mxu0 0.0
        %766 = vmatpush1.msra.mxu0 0.0
        %767 = vmatprep.subr.mxu0 0.0
        %768 = vmatpush1.msra.mxu0 0.0
        %769 = vmatprep.subr.mxu0 0.0
        %770 = vmatpush1.msra.mxu0 0.0
        %771 = vmatprep.subr.mxu0 0.0
        %772 = vmatpush1.msra.mxu0 0.0
        %773 = vmatprep.subr.mxu0 0.0
        %774 = vmatpush1.msra.mxu0 0.0
        %775 = vmatprep.subr.mxu0 0.0
        %776 = vmatpush1.msra.mxu0 0.0
        %777 = vmatprep.subr.mxu0 0.0
        %778 = vmatpush1.msra.mxu0 0.0
        %779 = vmatprep.subr.mxu0 0.0
        %780 = vmatpush1.msra.mxu0 0.0
        %781 = vmatprep.subr.mxu0 0.0
        %782 = vmatpush1.msra.mxu0 0.0
        %783 = vmatprep.subr.mxu0 0.0
        %784 = vmatpush1.msra.mxu0 0.0
        %785 = vmatprep.subr.mxu0 0.0
        %786 = vmatpush1.msra.mxu0 0.0
        %787 = vmatprep.subr.mxu0 0.0
        %788 = vmatpush1.msra.mxu0 0.0
        %789 = vmatprep.subr.mxu0 0.0
        %790 = vmatpush1.msra.mxu0 0.0
        %791 = vmatprep.subr.mxu0 0.0
        %792 = vmatpush1.msra.mxu0 0.0
        %793 = vmatprep.subr.mxu0 0.0
        %794 = vmatpush1.msra.mxu0 0.0
        %795 = vmatprep.subr.mxu0 0.0
        %796 = vmatpush1.msra.mxu0 0.0
        %797 = vmatprep.subr.mxu0 0.0
        %798 = vmatpush1.msra.mxu0 0.0
        %799 = vmatprep.subr.mxu0 0.0
        %800 = vmatpush1.msra.mxu0 0.0
        %801 = vmatprep.subr.mxu0 0.0
        %802 = vmatpush1.msra.mxu0 0.0
        %803 = vmatprep.subr.mxu0 0.0
        %804 = vmatpush1.msra.mxu0 0.0
        %805 = vmatprep.subr.mxu0 0.0
        %806 = vmatpush1.msra.mxu0 0.0
        %807 = vmatprep.subr.mxu0 0.0
        %808 = vmatpush1.msra.mxu0 0.0
        %809 = vmatprep.subr.mxu0 0.0
        %810 = vmatpush1.msra.mxu0 0.0
        %811 = vmatprep.subr.mxu0 0.0
        %812 = vmatpush1.msra.mxu0 0.0
        %813 = vmatprep.subr.mxu0 0.0
        %814 = vmatpush1.msra.mxu0 0.0
        %815 = vmatprep.mubr.f32.mxu0 0.0
        %816 = vmatmul.mubr.f32.gmra.mrb[0].mxu0 %v749
        %v817 = vpop.f32.mrb[0].mxu0
        %v818 = vadd.f32 %v747, %v817
        %v819 = vpop.f32.mrb[0].mxu0
        %820 = vdwg.mxu0
        %v821 = vld [vmem:[#allocation10 + $0x20] sm:$0xff]
        %v822 = vld [vmem:[#allocation10 + $0x28] sm:$0xff]
        %v823 = vld [vmem:[#allocation10 + $0x30] sm:$0xff]
        %v824 = vld [vmem:[#allocation10 + $0x38] sm:$0xff]
        %v825 = vld [vmem:[%s5 + $0x3] sm:$0x1]
        %v826 = vlaneseq
        %v827 = vshrl.u32 %v826, 7
        %v828 = vsub.s32 0, %v827
        %v829 = vrot.slane %v825, %v828
        %830 = vmatprep.subr.mxu0 0.0
        %831 = vmatpush1.msra.mxu0 %v821
        %832 = vmatprep.subr.mxu0 0.0
        %833 = vmatpush1.msra.mxu0 %v822
        %834 = vmatprep.subr.mxu0 0.0
        %835 = vmatpush1.msra.mxu0 %v823
        %836 = vmatprep.subr.mxu0 0.0
        %837 = vmatpush1.msra.mxu0 %v824
        %838 = vmatprep.subr.mxu0 0.0
        %839 = vmatpush1.msra.mxu0 0.0
        %840 = vmatprep.subr.mxu0 0.0
        %841 = vmatpush1.msra.mxu0 0.0
        %842 = vmatprep.subr.mxu0 0.0
        %843 = vmatpush1.msra.mxu0 0.0
        %844 = vmatprep.subr.mxu0 0.0
        %845 = vmatpush1.msra.mxu0 0.0
        %846 = vmatprep.subr.mxu0 0.0
        %847 = vmatpush1.msra.mxu0 0.0
        %848 = vmatprep.subr.mxu0 0.0
        %849 = vmatpush1.msra.mxu0 0.0
        %850 = vmatprep.subr.mxu0 0.0
        %851 = vmatpush1.msra.mxu0 0.0
        %852 = vmatprep.subr.mxu0 0.0
        %853 = vmatpush1.msra.mxu0 0.0
        %854 = vmatprep.subr.mxu0 0.0
        %855 = vmatpush1.msra.mxu0 0.0
        %856 = vmatprep.subr.mxu0 0.0
        %857 = vmatpush1.msra.mxu0 0.0
        %858 = vmatprep.subr.mxu0 0.0
        %859 = vmatpush1.msra.mxu0 0.0
        %860 = vmatprep.subr.mxu0 0.0
        %861 = vmatpush1.msra.mxu0 0.0
        %862 = vmatprep.subr.mxu0 0.0
        %863 = vmatpush1.msra.mxu0 0.0
        %864 = vmatprep.subr.mxu0 0.0
        %865 = vmatpush1.msra.mxu0 0.0
        %866 = vmatprep.subr.mxu0 0.0
        %867 = vmatpush1.msra.mxu0 0.0
        %868 = vmatprep.subr.mxu0 0.0
        %869 = vmatpush1.msra.mxu0 0.0
        %870 = vmatprep.subr.mxu0 0.0
        %871 = vmatpush1.msra.mxu0 0.0
        %872 = vmatprep.subr.mxu0 0.0
        %873 = vmatpush1.msra.mxu0 0.0
        %874 = vmatprep.subr.mxu0 0.0
        %875 = vmatpush1.msra.mxu0 0.0
        %876 = vmatprep.subr.mxu0 0.0
        %877 = vmatpush1.msra.mxu0 0.0
        %878 = vmatprep.subr.mxu0 0.0
        %879 = vmatpush1.msra.mxu0 0.0
        %880 = vmatprep.subr.mxu0 0.0
        %881 = vmatpush1.msra.mxu0 0.0
        %882 = vmatprep.subr.mxu0 0.0
        %883 = vmatpush1.msra.mxu0 0.0
        %884 = vmatprep.subr.mxu0 0.0
        %885 = vmatpush1.msra.mxu0 0.0
        %886 = vmatprep.subr.mxu0 0.0
        %887 = vmatpush1.msra.mxu0 0.0
        %888 = vmatprep.subr.mxu0 0.0
        %889 = vmatpush1.msra.mxu0 0.0
        %890 = vmatprep.subr.mxu0 0.0
        %891 = vmatpush1.msra.mxu0 0.0
        %892 = vmatprep.subr.mxu0 0.0
        %893 = vmatpush1.msra.mxu0 0.0
        %894 = vmatprep.mubr.f32.mxu0 0.0
        %895 = vmatmul.mubr.f32.gmra.mrb[0].mxu0 %v340
        %v896 = vpop.f32.mrb[0].mxu0
        %v897 = vadd.f32 %v829, %v896
        %v898 = vpop.f32.mrb[0].mxu0
        %899 = vdwg.mxu0
        %v900 = vadd.f32 %v818, %v897
        %v901 = vxor.u32 %v900, 2147483648
        %v902 = vmul.f32 %v901, 1.442695
        %v903 = vpow.pop %v902
        %v904 = vadd.f32 %v903, 1.0
        %v905 = vrcp.pop %v904
        %v906 = vmul.f32 1.0, %v905
        %908 = vrot.lane.b32.xlu0 %v897, 64
        %v909 = vpop.permute.xlu0 %908
        %v911 = vmul.f32 %v906, %v909
        %913 = vrot.lane.b32.xlu0 %v911, 64
        %v914 = vpop.permute.xlu0 %913
        %v916 = vadd.f32 %v818, %v914
        %v917 = vtanh.pop %v916
        %v918 = vsub.f32 1.0, %v906
        %920 = vrot.lane.b32.xlu0 %v917, 96
        %v921 = vpop.permute.xlu0 %920
        %v923 = vmul.f32 %v918, %v921
        %924 = vrot.lane.b32.xlu0 %v331, 32
        %v925 = vpop.permute.xlu0 %924
        %v927 = vmul.f32 %v906, %v925
        %v928 = vadd.f32 %v923, %v927
        %v929 = vld [vmem:[#allocation10 + $0x40] sm:$0xff]
        %v930 = vld [vmem:[#allocation10 + $0x48] sm:$0xff]
        %v931 = vld [vmem:[#allocation10 + $0x50] sm:$0xff]
        %v932 = vld [vmem:[#allocation10 + $0x58] sm:$0xff]
        %v933 = vld [vmem:[%s5 + $0x4] sm:$0x1]
        %v934 = vlaneseq
        %v935 = vshrl.u32 %v934, 7
        %v936 = vsub.s32 0, %v935
        %v937 = vrot.slane %v933, %v936
        %939 = vrot.lane.b32.xlu0 %v928, 96
        %v940 = vpop.permute.xlu0 %939
        %v941 = vsel %vm338, %v940, 0
        %943 = vmatprep.subr.mxu0 0.0
        %944 = vmatpush1.msra.mxu0 %v929
        %945 = vmatprep.subr.mxu0 0.0
        %946 = vmatpush1.msra.mxu0 %v930
        %947 = vmatprep.subr.mxu0 0.0
        %948 = vmatpush1.msra.mxu0 %v931
        %949 = vmatprep.subr.mxu0 0.0
        %950 = vmatpush1.msra.mxu0 %v932
        %951 = vmatprep.subr.mxu0 0.0
        %952 = vmatpush1.msra.mxu0 0.0
        %953 = vmatprep.subr.mxu0 0.0
        %954 = vmatpush1.msra.mxu0 0.0
        %955 = vmatprep.subr.mxu0 0.0
        %956 = vmatpush1.msra.mxu0 0.0
        %957 = vmatprep.subr.mxu0 0.0
        %958 = vmatpush1.msra.mxu0 0.0
        %959 = vmatprep.subr.mxu0 0.0
        %960 = vmatpush1.msra.mxu0 0.0
        %961 = vmatprep.subr.mxu0 0.0
        %962 = vmatpush1.msra.mxu0 0.0
        %963 = vmatprep.subr.mxu0 0.0
        %964 = vmatpush1.msra.mxu0 0.0
        %965 = vmatprep.subr.mxu0 0.0
        %966 = vmatpush1.msra.mxu0 0.0
        %967 = vmatprep.subr.mxu0 0.0
        %968 = vmatpush1.msra.mxu0 0.0
        %969 = vmatprep.subr.mxu0 0.0
        %970 = vmatpush1.msra.mxu0 0.0
        %971 = vmatprep.subr.mxu0 0.0
        %972 = vmatpush1.msra.mxu0 0.0
        %973 = vmatprep.subr.mxu0 0.0
        %974 = vmatpush1.msra.mxu0 0.0
        %975 = vmatprep.subr.mxu0 0.0
        %976 = vmatpush1.msra.mxu0 0.0
        %977 = vmatprep.subr.mxu0 0.0
        %978 = vmatpush1.msra.mxu0 0.0
        %979 = vmatprep.subr.mxu0 0.0
        %980 = vmatpush1.msra.mxu0 0.0
        %981 = vmatprep.subr.mxu0 0.0
        %982 = vmatpush1.msra.mxu0 0.0
        %983 = vmatprep.subr.mxu0 0.0
        %984 = vmatpush1.msra.mxu0 0.0
        %985 = vmatprep.subr.mxu0 0.0
        %986 = vmatpush1.msra.mxu0 0.0
        %987 = vmatprep.subr.mxu0 0.0
        %988 = vmatpush1.msra.mxu0 0.0
        %989 = vmatprep.subr.mxu0 0.0
        %990 = vmatpush1.msra.mxu0 0.0
        %991 = vmatprep.subr.mxu0 0.0
        %992 = vmatpush1.msra.mxu0 0.0
        %993 = vmatprep.subr.mxu0 0.0
        %994 = vmatpush1.msra.mxu0 0.0
        %995 = vmatprep.subr.mxu0 0.0
        %996 = vmatpush1.msra.mxu0 0.0
        %997 = vmatprep.subr.mxu0 0.0
        %998 = vmatpush1.msra.mxu0 0.0
        %999 = vmatprep.subr.mxu0 0.0
        %1000 = vmatpush1.msra.mxu0 0.0
        %1001 = vmatprep.subr.mxu0 0.0
        %1002 = vmatpush1.msra.mxu0 0.0
        %1003 = vmatprep.subr.mxu0 0.0
        %1004 = vmatpush1.msra.mxu0 0.0
        %1005 = vmatprep.subr.mxu0 0.0
        %1006 = vmatpush1.msra.mxu0 0.0
        %1007 = vmatprep.mubr.f32.mxu0 0.0
        %1008 = vmatmul.mubr.f32.gmra.mrb[0].mxu0 %v941
        %v1009 = vpop.f32.mrb[0].mxu0
        %v1010 = vadd.f32 %v937, %v1009
        %v1011 = vpop.f32.mrb[0].mxu0
        %1012 = vdwg.mxu0
        %v1013 = vsel %vm412, %v1010, -inf
        %1014 = vmax.xlane.f32.xlu0 %v1013
        %v1015 = vpop.xlane.xlu0 %1014
        %v1016 = vsub.f32 %v1010, %v1015
        %v1017 = vmul.f32 %v1016, 1.442695
        %v1018 = vpow.pop %v1017
        %v1019 = vsel %vm412, %v1018, 0.0
        %1020 = vadd.xlane.f32.xlu0 %v1019
        %v1021 = vpop.xlane.xlu0 %1020
        %v1022 = vlog2.pop %v1021
        %v1023 = vmul.f32 %v1022, 0.6931472
        %v1024 = vadd.f32 %v1023, %v1015
        %v1025 = vsub.f32 %v1010, %v1024
        %1027 = vst.msk [vmem:[#allocation2] sm:$0xff] %vm338, %v940
        %1028 = vrot.lane.b32.xlu0 %v928, 112
        %v1029 = vpop.permute.xlu0 %1028
        %1031 = vrot.lane.b32.xlu0 %v503, 48
        %v1032 = vpop.permute.xlu0 %1031
        %v1034 = vsel %vm412, %v1025, %v1029
        %vm1035 = vcmask 392192
        %v1036 = vsel %vm1035, %v1034, %v1032
        %vm1037 = vcmask 474112
        %v1038 = vsel %vm1037, %v1036, 0.0
        %1039 = vst [vmem:[%s322] sm:$0xff] %v1038
        %p1040 = scmp.lt.s32.totalorder %s22, 2
        %s1041 = scalar_select %p1040, %s22, 2
        %s1042 = smul.addr %s1041, 8
        %s1043 = scalar_lea.vmem %s6, %s1042
        // Predicated region
        $region69: #{attn_decoder_decode.1} parent=43 // pred_check
          %p1044 = pneg %p171
        $region70: #{attn_decoder_decode.1} parent=43 // pred_check_branch
          %1046 = sbr.rel (%p1044) target = $region72
        $region71: #{attn_decoder_decode.1} parent=43 // pred_region
          _
        $region72: #{attn_decoder_decode.1} parent=43 // pred_fallthru
          _
      $region44: #{attn_decoder_decode.1} parent=5 // pred_fallthru
        _
      %p1047 = scmp.le.s32.totalorder 2, %s17
      // Predicated region
      $region73: #{attn_decoder_decode.1} parent=5 // pred_check
        %p1048 = pneg %p1047
      $region74: #{attn_decoder_decode.1} parent=5 // pred_check_branch
        %1050 = sbr.rel (%p1048) target = $region76
      $region75: #{attn_decoder_decode.1} parent=5 // pred_region
        %s1051 = ssub.s32 %s17, 2
        // Predicated region
        $region77: #{attn_decoder_decode.1} parent=75 // pred_check
          %p1052 = pneg %p177
        $region78: #{attn_decoder_decode.1} parent=75 // pred_check_branch
          %1054 = sbr.rel (%p1052) target = $region80
        $region79: #{attn_decoder_decode.1} parent=75 // pred_region
          %p1055 = scmp.lt.s32.totalorder %s23, 2
          %s1056 = scalar_select %p1055, %s23, 2
          %s1057 = smul.addr %s1056, 8
          %s1058 = scalar_lea.vmem %s6, %s1057
        $region80: #{attn_decoder_decode.1} parent=75 // pred_fallthru
          _
      $region76: #{attn_decoder_decode.1} parent=5 // pred_fallthru
        _
    $region6: #{attn_decoder_decode.1} parent=1 // loop_footer
      %s21 = sadd.s32 1, %s17
    $region7: #{attn_decoder_decode.1} parent=1 // loop_footer_branch
      %16 = sbr.rel target = $region3
    $region8: #{attn_decoder_decode.1} parent=1 // loop_exit
      _
    %1059 = vsyncpa [#allocation4], 1
    %s1060 = scalar_lea.sflag [#allocation4], 1
    %1061 = vsyncpa %s1060, 1
    %1062 = vsyncpa [#allocation6], 1
    %1063 = vsyncpa [#allocation9], 1

</llo_original>
